<compile_context>
chip_gen: v6e
topology: v6e:2x2x1
jax: 0.10.0
libtpu: 0.0.40
codegen_flags: <defaults>
</compile_context>

<pallas_src>
import jax
import jax.numpy as jnp
from jax.experimental import pallas as pl
from jax.experimental.pallas import tpu as pltpu


def _mlp_kernel(x_ref, w1_ref, b1_ref, w2_ref, b2_ref, o_ref):
    # x:  (TB, D)  -- one batch tile (last block may be ragged / garbage tail)
    # w1: (D, H), b1: (1, H)   -- resident
    # w2: (1, H)               -- second-layer weight row (pre-transposed), resident
    # b2: (1,) in SMEM         -- scalar second-layer bias
    # o:  (1, TB)              -- lane-dense output row for this tile
    x = x_ref[...]
    h = jnp.dot(x, w1_ref[...], preferred_element_type=jnp.float32) + b1_ref[...]
    # sigmoid(h) == 0.5 * (tanh(0.5*h) + 1): single EUP transcendental, no divide.
    h = 0.5 * (jnp.tanh(0.5 * h) + 1.0)
    # N=1 output column: VPU multiply + cross-lane (XLU) reduction instead of a
    # nearly-empty MXU matmul stream.  Fold the scalar b2 here.
    out = jnp.sum(h * w2_ref[...], axis=-1) + b2_ref[0]       # (TB,)
    o_ref[...] = out[None, :].astype(o_ref.dtype)             # lane-dense (1, TB)


def neural_net_forward(x, w1, b1, w2, b2, *,
                       max_tile_b=4096, vmem_budget_bytes=24 * 1024 * 1024):
    """Forward pass of NeuralNet. Returns shape (batch,), matching .squeeze(1)."""
    B, D = x.shape
    H = w1.shape[1]

    # ---- VMEM-aware batch-tile sizing -------------------------------------
    # Per tile (f32):  2 double-buffered x tiles of tb*max(D,128),
    #                  hidden intermediate tb*max(H,128),
    #                  2 output buffers of 8*tb (sublane-padded (1, tb)).
    d_pad = max(D, 128)
    h_pad = max(H, 128)
    bytes_per_row = 4 * (2 * d_pad + h_pad + 2 * 8)
    vmem_rows = max(128, (vmem_budget_bytes // bytes_per_row // 128) * 128)
    tb_cap = max(128, min(max_tile_b, vmem_rows))

    if B > tb_cap:
        tb = tb_cap
    elif B > 256:
        # Guarantee >= 2 tiles so the "parallel" batch axis can use both
        # TensorCores on v7x; neutral on single-TC v5e/v6e.
        tb = 128 * pl.cdiv(pl.cdiv(B, 2), 128)
    else:
        tb = 128 * pl.cdiv(B, 128)
    num_tiles = pl.cdiv(B, tb)

    w2_row = w2.reshape(1, H)                    # (H, 1) -> (1, H)
    b2_s = b2.reshape((1,)).astype(jnp.float32)  # scalar bias, lives in SMEM

    slab = pl.pallas_call(
        _mlp_kernel,
        out_shape=jax.ShapeDtypeStruct((num_tiles, tb), jnp.float32),
        grid_spec=pltpu.PrefetchScalarGridSpec(
            num_scalar_prefetch=0,
            grid=(num_tiles,),
            in_specs=[
                pl.BlockSpec((tb, D), lambda i: (i, 0)),    # x: tiled over batch
                pl.BlockSpec((D, H), lambda i: (0, 0)),     # w1: resident
                pl.BlockSpec((1, H), lambda i: (0, 0)),     # b1: resident
                pl.BlockSpec((1, H), lambda i: (0, 0)),     # w2 row: resident
                pl.BlockSpec(memory_space=pltpu.MemorySpace.SMEM),  # b2 scalar
            ],
            out_specs=pl.BlockSpec((1, tb), lambda i: (i, 0)),
        ),
        compiler_params=pltpu.CompilerParams(
            dimension_semantics=("parallel",),              # shard tiles across TCs (v7x)
            vmem_limit_bytes=40 * 1024 * 1024,              # safe on v5e/v6e/v7x
        ),
    )(x, w1, b1, w2_row, b2_s)

    # squeeze(1): flatten the lane-dense slab and drop the ragged tail.
    return slab.reshape(-1)[:B]


def init_params(key, input_dim, hidden=64):
    """Deterministic PyTorch-style (uniform +/- 1/sqrt(fan_in)) initialization."""
    k1, k2, k3, k4 = jax.random.split(key, 4)
    bound1 = 1.0 / jnp.sqrt(input_dim)
    bound2 = 1.0 / jnp.sqrt(hidden)
    # Stored as (in_features, out_features) == transposed PyTorch weight.
    w1 = jax.random.uniform(k1, (input_dim, hidden), jnp.float32, -bound1, bound1)
    b1 = jax.random.uniform(k2, (1, hidden), jnp.float32, -bound1, bound1)
    w2 = jax.random.uniform(k3, (hidden, 1), jnp.float32, -bound2, bound2)
    b2 = jax.random.uniform(k4, (1, 1), jnp.float32, -bound2, bound2)
    return w1, b1, w2, b2


def _reference_forward(x, w1, b1, w2, b2):
    h = jax.nn.sigmoid(x @ w1 + b1)
    return (h @ w2 + b2)[:, 0]


if __name__ == "__main__":
    key = jax.random.PRNGKey(0)
    kx, kp, kx2 = jax.random.split(key, 3)

    input_dim = 32
    w1, b1, w2, b2 = init_params(kp, input_dim)

    # Small shape consistent with the (batch_size x input_dim) forward:
    # single ragged tile (8 rows inside a 128-row block).
    batch = 8
    x = jax.random.normal(kx, (batch, input_dim), jnp.float32)
    pred = neural_net_forward(x, w1, b1, w2, b2)
    jax.block_until_ready(pred)
    ref = _reference_forward(x, w1, b1, w2, b2)
    assert pred.shape == (batch,)
    assert jnp.allclose(pred, ref, atol=1e-4, rtol=1e-4)

    # Larger, non-tile-aligned batch: exercises the multi-tile pipelined grid
    # (2 tiles for the v7x megacore split) and the ragged last block.
    big_batch = 1000
    x_big = jax.random.normal(kx2, (big_batch, input_dim), jnp.float32)
    pred_big = neural_net_forward(x_big, w1, b1, w2, b2)
    jax.block_until_ready(pred_big)
    ref_big = _reference_forward(x_big, w1, b1, w2, b2)
    assert pred_big.shape == (big_batch,)
    assert jnp.allclose(pred_big, ref_big, atol=1e-4, rtol=1e-4)

    print("KERNEL_OK")
</pallas_src>

<mosaic_0001>
module attributes {stable_mosaic.version = 11 : i64} {
  func.func @_mlp_kernel(%arg0: i32, %arg1: memref<128x32xf32, #tpu.memory_space<vmem>>, %arg2: memref<32x64xf32, #tpu.memory_space<vmem>>, %arg3: memref<1x64xf32, #tpu.memory_space<vmem>>, %arg4: memref<1x64xf32, #tpu.memory_space<vmem>>, %arg5: memref<1xf32, #tpu.memory_space<smem>>, %arg6: memref<1x128xf32, #tpu.memory_space<vmem>>) attributes {dimension_semantics = [#tpu.dimension_semantics<parallel>], iteration_bounds = array<i64: 1>, scalar_prefetch = 0 : i64, scratch_operands = 0 : i64, tpu.core_type = #tpu.core_type<tc>, window_params = [{transform_indices = @transform_0, window_bounds = array<i64: 128, 32>}, {pipeline_mode = #tpu.pipeline_mode<synchronous>, transform_indices = @transform_1, window_bounds = array<i64: 32, 64>}, {pipeline_mode = #tpu.pipeline_mode<synchronous>, transform_indices = @transform_2, window_bounds = array<i64: 1, 64>}, {pipeline_mode = #tpu.pipeline_mode<synchronous>, transform_indices = @transform_3, window_bounds = array<i64: 1, 64>}, {transform_indices = @transform_4, window_bounds = array<i64: 1>}, {transform_indices = @transform_5, window_bounds = array<i64: 1, 128>}]} {
    %c0 = arith.constant 0 : index
    %c0_0 = arith.constant 0 : index
    %0 = vector.load %arg1[%c0, %c0_0] : memref<128x32xf32, #tpu.memory_space<vmem>>, vector<128x32xf32>
    %c0_1 = arith.constant 0 : index
    %c0_2 = arith.constant 0 : index
    %1 = vector.load %arg2[%c0_1, %c0_2] : memref<32x64xf32, #tpu.memory_space<vmem>>, vector<32x64xf32>
    %cst = arith.constant dense<0.000000e+00> : vector<128x64xf32>
    %2 = tpu.matmul %0, %1, %cst {dimension_numbers = #tpu.dot_dimension_numbers<[1], [0], [0], [1], [0, 0, 1, 1], [], []>} : vector<128x32xf32>, vector<32x64xf32>, vector<128x64xf32> -> vector<128x64xf32>
    %c0_3 = arith.constant 0 : index
    %c0_4 = arith.constant 0 : index
    %3 = vector.load %arg3[%c0_3, %c0_4] : memref<1x64xf32, #tpu.memory_space<vmem>>, vector<1x64xf32>
    %4 = vector.broadcast %3 : vector<1x64xf32> to vector<128x64xf32>
    %5 = arith.addf %2, %4 : vector<128x64xf32>
    %cst_5 = arith.constant 5.000000e-01 : f32
    %6 = vector.broadcast %cst_5 : f32 to vector<128x64xf32>
    %7 = arith.mulf %6, %5 : vector<128x64xf32>
    %8 = math.tanh %7 : vector<128x64xf32>
    %cst_6 = arith.constant 1.000000e+00 : f32
    %9 = vector.broadcast %cst_6 : f32 to vector<128x64xf32>
    %10 = arith.addf %8, %9 : vector<128x64xf32>
    %cst_7 = arith.constant 5.000000e-01 : f32
    %11 = vector.broadcast %cst_7 : f32 to vector<128x64xf32>
    %12 = arith.mulf %11, %10 : vector<128x64xf32>
    %c0_8 = arith.constant 0 : index
    %c0_9 = arith.constant 0 : index
    %13 = vector.load %arg4[%c0_8, %c0_9] : memref<1x64xf32, #tpu.memory_space<vmem>>, vector<1x64xf32>
    %14 = vector.broadcast %13 : vector<1x64xf32> to vector<128x64xf32>
    %15 = arith.mulf %12, %14 : vector<128x64xf32>
    %cst_10 = arith.constant dense<0.000000e+00> : vector<128xf32>
    %16 = vector.multi_reduction <add>, %15, %cst_10 [1] : vector<128x64xf32> to vector<128xf32>
    %c0_11 = arith.constant 0 : index
    %17 = memref.load %arg5[%c0_11] : memref<1xf32, #tpu.memory_space<smem>>
    %18 = vector.broadcast %17 : f32 to vector<128xf32>
    %19 = arith.addf %16, %18 : vector<128xf32>
    %20 = vector.shape_cast %19 : vector<128xf32> to vector<1x128xf32>
    %c0_12 = arith.constant 0 : index
    %c0_13 = arith.constant 0 : index
    %21 = vector.load %arg6[%c0_12, %c0_13] : memref<1x128xf32, #tpu.memory_space<vmem>>, vector<1x128xf32>
    tpu.vector_store %arg6[%c0_12, %c0_13], %20 {strides = array<i32>} : memref<1x128xf32, #tpu.memory_space<vmem>>, vector<1x128xf32>,
    return
  }
  func.func @transform_0(%arg0: i32) -> (i32, i32) {
    %c0_i32 = arith.constant 0 : i32
    %c0_i32_0 = arith.constant 0 : i32
    return %arg0, %c0_i32 : i32, i32
  }
  func.func @transform_1(%arg0: i32) -> (i32, i32) {
    %c0_i32 = arith.constant 0 : i32
    %c0_i32_0 = arith.constant 0 : i32
    %c0_i32_1 = arith.constant 0 : i32
    return %c0_i32, %c0_i32_0 : i32, i32
  }
  func.func @transform_2(%arg0: i32) -> (i32, i32) {
    %c0_i32 = arith.constant 0 : i32
    %c0_i32_0 = arith.constant 0 : i32
    %c0_i32_1 = arith.constant 0 : i32
    return %c0_i32, %c0_i32_0 : i32, i32
  }
  func.func @transform_3(%arg0: i32) -> (i32, i32) {
    %c0_i32 = arith.constant 0 : i32
    %c0_i32_0 = arith.constant 0 : i32
    %c0_i32_1 = arith.constant 0 : i32
    return %c0_i32, %c0_i32_0 : i32, i32
  }
  func.func @transform_4(%arg0: i32) -> i32 {
    %c0_i32 = arith.constant 0 : i32
    %c0_i32_0 = arith.constant 0 : i32
    return %c0_i32 : i32
  }
  func.func @transform_5(%arg0: i32) -> (i32, i32) {
    %c0_i32 = arith.constant 0 : i32
    %c0_i32_0 = arith.constant 0 : i32
    return %arg0, %c0_i32 : i32, i32
  }
}

</mosaic_0001>

<llo_original>
// kernel: tpu_custom_call.1
$region0: #{tpu_custom_call.1}
  #allocation0 [shape = 'u32[]', space=smem, size = 0x4, offset = 0x4, fixed_abs, tag = 'smem constant byte address 0x4 - core index']
  #allocation1 [shape = 'u32[144,128]{1,0:T(1,128)}', space=vmem, size = 0x12000, scoped, tag = 'internal scratch']
  #allocation2 [shape = 'f32[1]{0:T(128)S(6)}', space=smem, size = 0x200, scoped, tag = 'scoped memory for tpu_custom_call.1']
  %s0 = inlined_call_operand.hbm [shape: f32[8,32], index: 0, kind: input, shape index: {}]
  %s1 = inlined_call_operand.hbm [shape: f32[32,64], index: 1, kind: input, shape index: {}]
  %s2 = inlined_call_operand.vmem [shape: f32[1,64], index: 2, kind: input, shape index: {}]
  %s3 = inlined_call_operand.vmem [shape: f32[1,64], index: 3, kind: input, shape index: {}]
  %s4 = inlined_call_operand.<no memory space> [shape: f32[1], index: 4, kind: input, shape index: {}]
  %s5 = inlined_call_operand.hbm [shape: f32[1,128], index: 5, kind: output, shape index: {}]
  %s6 = sld [smem:[#allocation0]]
  $region38: #{tpu_custom_call.1} parent=0
    _
  %s8 = ssub.s32 1, %s6
  %s9 = scalar_select 0, %s8, %s6
  %10 = sst [smem:[#allocation2]] %s4
  $region1: #{tpu_custom_call.1} parent=0
    #allocation3 [shape = 'u8[65536]{0}', space=vmem, size = 0x10000, scoped, tag = 'input window, operand 0, single buffered']
    #allocation4 [shape = 's32[1]{0}', space=sflag, size = 0x4, scoped, tag = 'scoped memory for tpu_custom_call.1']
    #allocation5 [shape = 's32[1]{0}', space=sflag, size = 0x4, scoped, tag = 'scoped memory for tpu_custom_call.1']
    #allocation6 [shape = 'u8[16384]{0}', space=vmem, size = 0x4000, scoped, tag = 'input window, operand 1, single buffered']
    #allocation7 [shape = 's32[1]{0}', space=sflag, size = 0x4, scoped, tag = 'scoped memory for tpu_custom_call.1']
    #allocation8 [shape = 'u8[512]{0}', space=vmem, size = 0x400, scoped, tag = 'output window, operand 0, single buffered']
    %11 = vsyncpa [#allocation4], 0
    %12 = vsyncpa [#allocation7], 0
    %13 = vsyncpa [#allocation5], 0
    // Predicated region
    $region2: #{tpu_custom_call.1} parent=1 // pred_check
      _
    $region3: #{tpu_custom_call.1} parent=1 // pred_check_branch
      %15 = sbr.rel (0) target = $region5
    $region4: #{tpu_custom_call.1} parent=1 // pred_region
      %s17 = ssub.s32 2048, 128
      %18 = vsyncadd [#allocation4], %s17
      %s19 = sshll.u32 [#allocation3], 4
      %s20 = int_to_ptr.vmem [resolvable:$true] %s19
      %25 = dma.hbm_to_vmem [thread:$0]  %s0, 128, %s20, [#allocation4], 128, 128, 8
    $region5: #{tpu_custom_call.1} parent=1 // pred_fallthru
      _
    // Predicated region
    $region6: #{tpu_custom_call.1} parent=1 // pred_check
      _
    $region7: #{tpu_custom_call.1} parent=1 // pred_check_branch
      %27 = sbr.rel (0) target = $region9
    $region8: #{tpu_custom_call.1} parent=1 // pred_region
      %s29 = ssub.s32 512, 512
      %30 = vsyncadd [#allocation7], %s29
      %s31 = sshll.u32 [#allocation6], 4
      %s32 = int_to_ptr.vmem [resolvable:$true] %s31
      %37 = dma.hbm_to_vmem [thread:$0]  %s1, 512, %s32, [#allocation7], 128, 128, 8
    $region9: #{tpu_custom_call.1} parent=1 // pred_fallthru
      _
    // Predicated region
    $region10: #{tpu_custom_call.1} parent=1 // pred_check
      _
    $region11: #{tpu_custom_call.1} parent=1 // pred_check_branch
      %39 = sbr.rel (0) target = $region13
    $region12: #{tpu_custom_call.1} parent=1 // pred_region
      _
    $region13: #{tpu_custom_call.1} parent=1 // pred_fallthru
      _
    // Predicated region
    $region14: #{tpu_custom_call.1} parent=1 // pred_check
      _
    $region15: #{tpu_custom_call.1} parent=1 // pred_check_branch
      %41 = sbr.rel (0) target = $region17
    $region16: #{tpu_custom_call.1} parent=1 // pred_region
      _
    $region17: #{tpu_custom_call.1} parent=1 // pred_fallthru
      _
    // Predicated region
    $region18: #{tpu_custom_call.1} parent=1 // pred_check
      _
    $region19: #{tpu_custom_call.1} parent=1 // pred_check_branch
      %43 = sbr.rel (0) target = $region21
    $region20: #{tpu_custom_call.1} parent=1 // pred_region
      _
    $region21: #{tpu_custom_call.1} parent=1 // pred_fallthru
      _
    // Predicated region
    $region22: #{tpu_custom_call.1} parent=1 // pred_check
      _
    $region23: #{tpu_custom_call.1} parent=1 // pred_check_branch
      %45 = sbr.rel (0) target = $region25
    $region24: #{tpu_custom_call.1} parent=1 // pred_region
      %46 = dma.done [#allocation4], 2048
    $region25: #{tpu_custom_call.1} parent=1 // pred_fallthru
      _
    // Predicated region
    $region26: #{tpu_custom_call.1} parent=1 // pred_check
      _
    $region27: #{tpu_custom_call.1} parent=1 // pred_check_branch
      %48 = sbr.rel (0) target = $region29
    $region28: #{tpu_custom_call.1} parent=1 // pred_region
      %49 = dma.done [#allocation7], 512
    $region29: #{tpu_custom_call.1} parent=1 // pred_fallthru
      _
    %v50 = vld [vmem:[#allocation3] sm:$0xff]
    %v51 = vld [vmem:[#allocation3 + $0x8] sm:$0xff]
    %v52 = vld [vmem:[#allocation3 + $0x10] sm:$0xff]
    %v53 = vld [vmem:[#allocation3 + $0x18] sm:$0xff]
    %v54 = vld [vmem:[#allocation3 + $0x20] sm:$0xff]
    %v55 = vld [vmem:[#allocation3 + $0x28] sm:$0xff]
    %v56 = vld [vmem:[#allocation3 + $0x30] sm:$0xff]
    %v57 = vld [vmem:[#allocation3 + $0x38] sm:$0xff]
    %v58 = vld [vmem:[#allocation3 + $0x40] sm:$0xff]
    %v59 = vld [vmem:[#allocation3 + $0x48] sm:$0xff]
    %v60 = vld [vmem:[#allocation3 + $0x50] sm:$0xff]
    %v61 = vld [vmem:[#allocation3 + $0x58] sm:$0xff]
    %v62 = vld [vmem:[#allocation3 + $0x60] sm:$0xff]
    %v63 = vld [vmem:[#allocation3 + $0x68] sm:$0xff]
    %v64 = vld [vmem:[#allocation3 + $0x70] sm:$0xff]
    %v65 = vld [vmem:[#allocation3 + $0x78] sm:$0xff]
    %v66 = vld [vmem:[#allocation6] sm:$0xff]
    %v67 = vld [vmem:[#allocation6 + $0x8] sm:$0xff]
    %v68 = vld [vmem:[#allocation6 + $0x10] sm:$0xff]
    %v69 = vld [vmem:[#allocation6 + $0x18] sm:$0xff]
    %v70 = vld [vmem:[%s2] sm:$0x1]
    %v72 = vlaneseq
    %v73 = vshrl.u32 %v72, 7
    %v74 = vsub.s32 0, %v73
    %v75 = vrot.slane %v70, %v74
    %vm77 = vcmask 261120
    %v79 = vsel %vm77, %v50, 0
    %v82 = vsel %vm77, %v51, 0
    %v85 = vsel %vm77, %v52, 0
    %v88 = vsel %vm77, %v53, 0
    %v91 = vsel %vm77, %v54, 0
    %v94 = vsel %vm77, %v55, 0
    %v97 = vsel %vm77, %v56, 0
    %v100 = vsel %vm77, %v57, 0
    %v103 = vsel %vm77, %v58, 0
    %v106 = vsel %vm77, %v59, 0
    %v109 = vsel %vm77, %v60, 0
    %v112 = vsel %vm77, %v61, 0
    %v115 = vsel %vm77, %v62, 0
    %v118 = vsel %vm77, %v63, 0
    %v121 = vsel %vm77, %v64, 0
    %v124 = vsel %vm77, %v65, 0
    %126 = vmatprep.subr.mxu0 0.0
    %127 = vmatpush1.msra.mxu0 0.0
    %128 = vmatprep.subr.mxu0 0.0
    %129 = vmatpush1.msra.mxu0 0.0
    %130 = vmatprep.subr.mxu0 0.0
    %131 = vmatpush1.msra.mxu0 0.0
    %132 = vmatprep.subr.mxu0 0.0
    %133 = vmatpush1.msra.mxu0 0.0
    %134 = vmatprep.subr.mxu0 0.0
    %135 = vmatpush1.msra.mxu0 0.0
    %136 = vmatprep.subr.mxu0 0.0
    %137 = vmatpush1.msra.mxu0 0.0
    %138 = vmatprep.subr.mxu0 0.0
    %139 = vmatpush1.msra.mxu0 0.0
    %140 = vmatprep.subr.mxu0 0.0
    %141 = vmatpush1.msra.mxu0 0.0
    %142 = vmatprep.subr.mxu0 0.0
    %143 = vmatpush1.msra.mxu0 0.0
    %144 = vmatprep.subr.mxu0 0.0
    %145 = vmatpush1.msra.mxu0 0.0
    %146 = vmatprep.subr.mxu0 0.0
    %147 = vmatpush1.msra.mxu0 0.0
    %148 = vmatprep.subr.mxu0 0.0
    %149 = vmatpush1.msra.mxu0 0.0
    %150 = vmatprep.subr.mxu0 0.0
    %151 = vmatpush1.msra.mxu0 %v69
    %152 = vmatprep.subr.mxu0 0.0
    %153 = vmatpush1.msra.mxu0 %v68
    %154 = vmatprep.subr.mxu0 0.0
    %155 = vmatpush1.msra.mxu0 %v67
    %156 = vmatprep.subr.mxu0 0.0
    %157 = vmatpush1.msra.mxu0 %v66
    %158 = vmatprep.subr.mxu0 0.0
    %159 = vmatpush2.msra.mxu0 0.0
    %160 = vmatprep.subr.mxu0 0.0
    %161 = vmatpush2.msra.mxu0 0.0
    %162 = vmatprep.subr.mxu0 0.0
    %163 = vmatpush2.msra.mxu0 0.0
    %164 = vmatprep.subr.mxu0 0.0
    %165 = vmatpush2.msra.mxu0 0.0
    %166 = vmatprep.subr.mxu0 0.0
    %167 = vmatpush2.msra.mxu0 0.0
    %168 = vmatprep.subr.mxu0 0.0
    %169 = vmatpush2.msra.mxu0 0.0
    %170 = vmatprep.subr.mxu0 0.0
    %171 = vmatpush2.msra.mxu0 0.0
    %172 = vmatprep.subr.mxu0 0.0
    %173 = vmatpush2.msra.mxu0 0.0
    %174 = vmatprep.subr.mxu0 0.0
    %175 = vmatpush2.msra.mxu0 0.0
    %176 = vmatprep.subr.mxu0 0.0
    %177 = vmatpush2.msra.mxu0 0.0
    %178 = vmatprep.subr.mxu0 0.0
    %179 = vmatpush2.msra.mxu0 0.0
    %180 = vmatprep.subr.mxu0 0.0
    %181 = vmatpush2.msra.mxu0 0.0
    %182 = vmatprep.subr.mxu0 0.0
    %183 = vmatpush2.msra.mxu0 0.0
    %184 = vmatprep.subr.mxu0 0.0
    %185 = vmatpush2.msra.mxu0 0.0
    %186 = vmatprep.subr.mxu0 0.0
    %187 = vmatpush2.msra.mxu0 0.0
    %188 = vmatprep.subr.mxu0 0.0
    %189 = vmatpush2.msra.mxu0 0.0
    %190 = vmatprep.mubr.f32.mxu0 0.0
    %191 = vmatmul.mubr.f32.gmra.mxu0 %v79
    %v192 = vpop.f32.mrf.mxu0
    %v193 = vadd.f32 %v75, %v192
    %v194 = vpop.f32.mrf.mxu0
    %195 = vmatprep.mubr.f32.mxu0 0.0
    %196 = vmatmul.mubr.f32.gmra.mxu0 %v82
    %v197 = vpop.f32.mrf.mxu0
    %v198 = vadd.f32 %v75, %v197
    %v199 = vpop.f32.mrf.mxu0
    %200 = vmatprep.mubr.f32.mxu0 0.0
    %201 = vmatmul.mubr.f32.gmra.mxu0 %v85
    %v202 = vpop.f32.mrf.mxu0
    %v203 = vadd.f32 %v75, %v202
    %v204 = vpop.f32.mrf.mxu0
    %205 = vmatprep.mubr.f32.mxu0 0.0
    %206 = vmatmul.mubr.f32.gmra.mxu0 %v88
    %v207 = vpop.f32.mrf.mxu0
    %v208 = vadd.f32 %v75, %v207
    %v209 = vpop.f32.mrf.mxu0
    %210 = vmatprep.mubr.f32.mxu0 0.0
    %211 = vmatmul.mubr.f32.gmra.mxu0 %v91
    %v212 = vpop.f32.mrf.mxu0
    %v213 = vadd.f32 %v75, %v212
    %v214 = vpop.f32.mrf.mxu0
    %215 = vmatprep.mubr.f32.mxu0 0.0
    %216 = vmatmul.mubr.f32.gmra.mxu0 %v94
    %v217 = vpop.f32.mrf.mxu0
    %v218 = vadd.f32 %v75, %v217
    %v219 = vpop.f32.mrf.mxu0
    %220 = vmatprep.mubr.f32.mxu0 0.0
    %221 = vmatmul.mubr.f32.gmra.mxu0 %v97
    %v222 = vpop.f32.mrf.mxu0
    %v223 = vadd.f32 %v75, %v222
    %v224 = vpop.f32.mrf.mxu0
    %225 = vmatprep.mubr.f32.mxu0 0.0
    %226 = vmatmul.mubr.f32.gmra.mxu0 %v100
    %v227 = vpop.f32.mrf.mxu0
    %v228 = vadd.f32 %v75, %v227
    %v229 = vpop.f32.mrf.mxu0
    %230 = vmatprep.mubr.f32.mxu0 0.0
    %231 = vmatmul.mubr.f32.gmra.mxu0 %v103
    %v232 = vpop.f32.mrf.mxu0
    %v233 = vadd.f32 %v75, %v232
    %v234 = vpop.f32.mrf.mxu0
    %235 = vmatprep.mubr.f32.mxu0 0.0
    %236 = vmatmul.mubr.f32.gmra.mxu0 %v106
    %v237 = vpop.f32.mrf.mxu0
    %v238 = vadd.f32 %v75, %v237
    %v239 = vpop.f32.mrf.mxu0
    %240 = vmatprep.mubr.f32.mxu0 0.0
    %241 = vmatmul.mubr.f32.gmra.mxu0 %v109
    %v242 = vpop.f32.mrf.mxu0
    %v243 = vadd.f32 %v75, %v242
    %v244 = vpop.f32.mrf.mxu0
    %245 = vmatprep.mubr.f32.mxu0 0.0
    %246 = vmatmul.mubr.f32.gmra.mxu0 %v112
    %v247 = vpop.f32.mrf.mxu0
    %v248 = vadd.f32 %v75, %v247
    %v249 = vpop.f32.mrf.mxu0
    %250 = vmatprep.mubr.f32.mxu0 0.0
    %251 = vmatmul.mubr.f32.gmra.mxu0 %v115
    %v252 = vpop.f32.mrf.mxu0
    %v253 = vadd.f32 %v75, %v252
    %v254 = vpop.f32.mrf.mxu0
    %255 = vmatprep.mubr.f32.mxu0 0.0
    %256 = vmatmul.mubr.f32.gmra.mxu0 %v118
    %v257 = vpop.f32.mrf.mxu0
    %v258 = vadd.f32 %v75, %v257
    %v259 = vpop.f32.mrf.mxu0
    %260 = vmatprep.mubr.f32.mxu0 0.0
    %261 = vmatmul.mubr.f32.gmra.mxu0 %v121
    %v262 = vpop.f32.mrf.mxu0
    %v263 = vadd.f32 %v75, %v262
    %v264 = vpop.f32.mrf.mxu0
    %265 = vmatprep.mubr.f32.mxu0 0.0
    %266 = vmatmul.mubr.f32.gmra.mxu0 %v124
    %v267 = vpop.f32.mrf.mxu0
    %v268 = vadd.f32 %v75, %v267
    %v269 = vpop.f32.mrf.mxu0
    %270 = vdwg.mxu0
    %v271 = vmul.f32 %v193, 0.5
    %v272 = vmul.f32 %v198, 0.5
    %v273 = vmul.f32 %v203, 0.5
    %v274 = vmul.f32 %v208, 0.5
    %v275 = vmul.f32 %v213, 0.5
    %v276 = vmul.f32 %v218, 0.5
    %v277 = vmul.f32 %v223, 0.5
    %v278 = vmul.f32 %v228, 0.5
    %v279 = vmul.f32 %v233, 0.5
    %v280 = vmul.f32 %v238, 0.5
    %v281 = vmul.f32 %v243, 0.5
    %v282 = vmul.f32 %v248, 0.5
    %v283 = vmul.f32 %v253, 0.5
    %v284 = vmul.f32 %v258, 0.5
    %v285 = vmul.f32 %v263, 0.5
    %v286 = vmul.f32 %v268, 0.5
    %v287 = vtanh.pop %v271
    %v288 = vtanh.pop %v272
    %v289 = vtanh.pop %v273
    %v290 = vtanh.pop %v274
    %v291 = vtanh.pop %v275
    %v292 = vtanh.pop %v276
    %v293 = vtanh.pop %v277
    %v294 = vtanh.pop %v278
    %v295 = vtanh.pop %v279
    %v296 = vtanh.pop %v280
    %v297 = vtanh.pop %v281
    %v298 = vtanh.pop %v282
    %v299 = vtanh.pop %v283
    %v300 = vtanh.pop %v284
    %v301 = vtanh.pop %v285
    %v302 = vtanh.pop %v286
    %v303 = vadd.f32 %v287, 1.0
    %v304 = vadd.f32 %v288, 1.0
    %v305 = vadd.f32 %v289, 1.0
    %v306 = vadd.f32 %v290, 1.0
    %v307 = vadd.f32 %v291, 1.0
    %v308 = vadd.f32 %v292, 1.0
    %v309 = vadd.f32 %v293, 1.0
    %v310 = vadd.f32 %v294, 1.0
    %v311 = vadd.f32 %v295, 1.0
    %v312 = vadd.f32 %v296, 1.0
    %v313 = vadd.f32 %v297, 1.0
    %v314 = vadd.f32 %v298, 1.0
    %v315 = vadd.f32 %v299, 1.0
    %v316 = vadd.f32 %v300, 1.0
    %v317 = vadd.f32 %v301, 1.0
    %v318 = vadd.f32 %v302, 1.0
    %v319 = vmul.f32 %v303, 0.5
    %v320 = vmul.f32 %v304, 0.5
    %v321 = vmul.f32 %v305, 0.5
    %v322 = vmul.f32 %v306, 0.5
    %v323 = vmul.f32 %v307, 0.5
    %v324 = vmul.f32 %v308, 0.5
    %v325 = vmul.f32 %v309, 0.5
    %v326 = vmul.f32 %v310, 0.5
    %v327 = vmul.f32 %v311, 0.5
    %v328 = vmul.f32 %v312, 0.5
    %v329 = vmul.f32 %v313, 0.5
    %v330 = vmul.f32 %v314, 0.5
    %v331 = vmul.f32 %v315, 0.5
    %v332 = vmul.f32 %v316, 0.5
    %v333 = vmul.f32 %v317, 0.5
    %v334 = vmul.f32 %v318, 0.5
    %v335 = vld [vmem:[%s3] sm:$0x1]
    %v337 = vlaneseq
    %v338 = vshrl.u32 %v337, 7
    %v339 = vsub.s32 0, %v338
    %v340 = vrot.slane %v335, %v339
    %v342 = vmul.f32 %v319, %v340
    %v343 = vmul.f32 %v320, %v340
    %v344 = vmul.f32 %v321, %v340
    %v345 = vmul.f32 %v322, %v340
    %v346 = vmul.f32 %v323, %v340
    %v347 = vmul.f32 %v324, %v340
    %v348 = vmul.f32 %v325, %v340
    %v349 = vmul.f32 %v326, %v340
    %v350 = vmul.f32 %v327, %v340
    %v351 = vmul.f32 %v328, %v340
    %v352 = vmul.f32 %v329, %v340
    %v353 = vmul.f32 %v330, %v340
    %v354 = vmul.f32 %v331, %v340
    %v355 = vmul.f32 %v332, %v340
    %v356 = vmul.f32 %v333, %v340
    %v357 = vmul.f32 %v334, %v340
    %vm358 = vcmask 523264
    %v359 = vsel %vm358, %v342, 0.0
    %360 = vadd.xlane.f32.xlu0 %v359
    %v361 = vpop.xlane.xlu0 %360
    %v362 = vsel %vm358, %v343, 0.0
    %363 = vadd.xlane.f32.xlu0 %v362
    %v364 = vpop.xlane.xlu0 %363
    %v365 = vsel %vm358, %v344, 0.0
    %366 = vadd.xlane.f32.xlu0 %v365
    %v367 = vpop.xlane.xlu0 %366
    %v368 = vsel %vm358, %v345, 0.0
    %369 = vadd.xlane.f32.xlu0 %v368
    %v370 = vpop.xlane.xlu0 %369
    %v371 = vsel %vm358, %v346, 0.0
    %372 = vadd.xlane.f32.xlu0 %v371
    %v373 = vpop.xlane.xlu0 %372
    %v374 = vsel %vm358, %v347, 0.0
    %375 = vadd.xlane.f32.xlu0 %v374
    %v376 = vpop.xlane.xlu0 %375
    %v377 = vsel %vm358, %v348, 0.0
    %378 = vadd.xlane.f32.xlu0 %v377
    %v379 = vpop.xlane.xlu0 %378
    %v380 = vsel %vm358, %v349, 0.0
    %381 = vadd.xlane.f32.xlu0 %v380
    %v382 = vpop.xlane.xlu0 %381
    %v383 = vsel %vm358, %v350, 0.0
    %384 = vadd.xlane.f32.xlu0 %v383
    %v385 = vpop.xlane.xlu0 %384
    %v386 = vsel %vm358, %v351, 0.0
    %387 = vadd.xlane.f32.xlu0 %v386
    %v388 = vpop.xlane.xlu0 %387
    %v389 = vsel %vm358, %v352, 0.0
    %390 = vadd.xlane.f32.xlu0 %v389
    %v391 = vpop.xlane.xlu0 %390
    %v392 = vsel %vm358, %v353, 0.0
    %393 = vadd.xlane.f32.xlu0 %v392
    %v394 = vpop.xlane.xlu0 %393
    %v395 = vsel %vm358, %v354, 0.0
    %396 = vadd.xlane.f32.xlu0 %v395
    %v397 = vpop.xlane.xlu0 %396
    %v398 = vsel %vm358, %v355, 0.0
    %399 = vadd.xlane.f32.xlu0 %v398
    %v400 = vpop.xlane.xlu0 %399
    %v401 = vsel %vm358, %v356, 0.0
    %402 = vadd.xlane.f32.xlu0 %v401
    %v403 = vpop.xlane.xlu0 %402
    %v404 = vsel %vm358, %v357, 0.0
    %405 = vadd.xlane.f32.xlu0 %v404
    %v406 = vpop.xlane.xlu0 %405
    %s407 = sld [smem:[#allocation2]]
    %v408 = vstv %s407
    %v409 = vadd.f32 %v361, %v408
    %v410 = vadd.f32 %v364, %v408
    %v411 = vadd.f32 %v367, %v408
    %v412 = vadd.f32 %v370, %v408
    %v413 = vadd.f32 %v373, %v408
    %v414 = vadd.f32 %v376, %v408
    %v415 = vadd.f32 %v379, %v408
    %v416 = vadd.f32 %v382, %v408
    %v417 = vadd.f32 %v385, %v408
    %v418 = vadd.f32 %v388, %v408
    %v419 = vadd.f32 %v391, %v408
    %v420 = vadd.f32 %v394, %v408
    %v421 = vadd.f32 %v397, %v408
    %v422 = vadd.f32 %v400, %v408
    %v423 = vadd.f32 %v403, %v408
    %v424 = vadd.f32 %v406, %v408
    %v441 = vlaneseq
    %v442 = vand.u32 %v441, 127
    %v443 = vlaneseq
    %v444 = vshrl.u32 %v443, 7
    %v445 = vsub.s32 %v442, %v444
    %v446 = vrot.slane %v409, %v445
    %v447 = vadd.s32 %v442, 4294967288
    %v448 = vlaneseq
    %v449 = vshrl.u32 %v448, 7
    %v450 = vsub.s32 %v447, %v449
    %v451 = vrot.slane %v410, %v450
    %vm452 = vcmask 130112
    %v453 = vsel %vm452, %v451, %v446
    %v454 = vadd.s32 %v442, 4294967280
    %v455 = vlaneseq
    %v456 = vshrl.u32 %v455, 7
    %v457 = vsub.s32 %v454, %v456
    %v458 = vrot.slane %v411, %v457
    %vm459 = vcmask 195712
    %v460 = vsel %vm459, %v458, %v453
    %v461 = vadd.s32 %v442, 4294967272
    %v462 = vlaneseq
    %v463 = vshrl.u32 %v462, 7
    %v464 = vsub.s32 %v461, %v463
    %v465 = vrot.slane %v412, %v464
    %vm466 = vcmask 261312
    %v467 = vsel %vm466, %v465, %v460
    %v468 = vadd.s32 %v442, 4294967264
    %v469 = vlaneseq
    %v470 = vshrl.u32 %v469, 7
    %v471 = vsub.s32 %v468, %v470
    %v472 = vrot.slane %v413, %v471
    %vm473 = vcmask 326912
    %v474 = vsel %vm473, %v472, %v467
    %v475 = vadd.s32 %v442, 4294967256
    %v476 = vlaneseq
    %v477 = vshrl.u32 %v476, 7
    %v478 = vsub.s32 %v475, %v477
    %v479 = vrot.slane %v414, %v478
    %vm480 = vcmask 392512
    %v481 = vsel %vm480, %v479, %v474
    %v482 = vadd.s32 %v442, 4294967248
    %v483 = vlaneseq
    %v484 = vshrl.u32 %v483, 7
    %v485 = vsub.s32 %v482, %v484
    %v486 = vrot.slane %v415, %v485
    %vm487 = vcmask 458112
    %v488 = vsel %vm487, %v486, %v481
    %v489 = vadd.s32 %v442, 4294967240
    %v490 = vlaneseq
    %v491 = vshrl.u32 %v490, 7
    %v492 = vsub.s32 %v489, %v491
    %v493 = vrot.slane %v416, %v492
    %vm494 = vcmask 523712
    %v495 = vsel %vm494, %v493, %v488
    %v496 = vadd.s32 %v442, 4294967232
    %v497 = vlaneseq
    %v498 = vshrl.u32 %v497, 7
    %v499 = vsub.s32 %v496, %v498
    %v500 = vrot.slane %v417, %v499
    %vm501 = vcmask 589312
    %v502 = vsel %vm501, %v500, %v495
    %v503 = vadd.s32 %v442, 4294967224
    %v504 = vlaneseq
    %v505 = vshrl.u32 %v504, 7
    %v506 = vsub.s32 %v503, %v505
    %v507 = vrot.slane %v418, %v506
    %vm508 = vcmask 654912
    %v509 = vsel %vm508, %v507, %v502
    %v510 = vadd.s32 %v442, 4294967216
    %v511 = vlaneseq
    %v512 = vshrl.u32 %v511, 7
    %v513 = vsub.s32 %v510, %v512
    %v514 = vrot.slane %v419, %v513
    %vm515 = vcmask 720512
    %v516 = vsel %vm515, %v514, %v509
    %v517 = vadd.s32 %v442, 4294967208
    %v518 = vlaneseq
    %v519 = vshrl.u32 %v518, 7
    %v520 = vsub.s32 %v517, %v519
    %v521 = vrot.slane %v420, %v520
    %vm522 = vcmask 786112
    %v523 = vsel %vm522, %v521, %v516
    %v524 = vadd.s32 %v442, 4294967200
    %v525 = vlaneseq
    %v526 = vshrl.u32 %v525, 7
    %v527 = vsub.s32 %v524, %v526
    %v528 = vrot.slane %v421, %v527
    %vm529 = vcmask 851712
    %v530 = vsel %vm529, %v528, %v523
    %v531 = vadd.s32 %v442, 4294967192
    %v532 = vlaneseq
    %v533 = vshrl.u32 %v532, 7
    %v534 = vsub.s32 %v531, %v533
    %v535 = vrot.slane %v422, %v534
    %vm536 = vcmask 917312
    %v537 = vsel %vm536, %v535, %v530
    %v538 = vadd.s32 %v442, 4294967184
    %v539 = vlaneseq
    %v540 = vshrl.u32 %v539, 7
    %v541 = vsub.s32 %v538, %v540
    %v542 = vrot.slane %v423, %v541
    %vm543 = vcmask 982912
    %v544 = vsel %vm543, %v542, %v537
    %v545 = vadd.s32 %v442, 4294967176
    %v546 = vlaneseq
    %v547 = vshrl.u32 %v546, 7
    %v548 = vsub.s32 %v545, %v547
    %v549 = vrot.slane %v424, %v548
    %vm550 = vcmask 1048512
    %v551 = vsel %vm550, %v549, %v544
    %553 = vst [vmem:[#allocation8] sm:$0x1] %v551
    // Predicated region
    $region30: #{tpu_custom_call.1} parent=1 // pred_check
      _
    $region31: #{tpu_custom_call.1} parent=1 // pred_check_branch
      %555 = sbr.rel (0) target = $region33
    $region32: #{tpu_custom_call.1} parent=1 // pred_region
      %s557 = ssub.s32 16, 16
      %558 = vsyncadd [#allocation5], %s557
      %s560 = sshll.u32 [#allocation8], 4
      %s561 = int_to_ptr.vmem [resolvable:$true] %s560
      %563 = dma.vmem_to_hbm [thread:$0]  %s561, 16, %s5, [#allocation5]
    $region33: #{tpu_custom_call.1} parent=1 // pred_fallthru
      _
    // Predicated region
    $region34: #{tpu_custom_call.1} parent=1 // pred_check
      _
    $region35: #{tpu_custom_call.1} parent=1 // pred_check_branch
      %565 = sbr.rel (0) target = $region37
    $region36: #{tpu_custom_call.1} parent=1 // pred_region
      %566 = dma.done [#allocation5], 16
    $region37: #{tpu_custom_call.1} parent=1 // pred_fallthru
      _
    %567 = vsyncpa [#allocation4], 1
    %568 = vsyncpa [#allocation7], 1
    %569 = vsyncpa [#allocation5], 1

</llo_original>
